<compile_context>
chip_gen: v6e
topology: v6e:2x2x1
jax: 0.10.0
libtpu: 0.0.40
codegen_flags: <defaults>
</compile_context>

<pallas_src>
import math

import jax
import jax.numpy as jnp
from jax.experimental import pallas as pl
from jax.experimental.pallas import tpu as pltpu


def _make_walk_embedding_kernel(B, L, F, E):
    scale = math.sqrt(E)  # trace-time Python constant, folded into the kernel

    def kernel(x_ref, w_ref, b_ref, cls_ref, o_ref):
        # x_ref:   (B, L, F)   walk steps
        # w_ref:   (F, E)      linear weight (pre-transposed, unscaled)
        # b_ref:   (1, E)      linear bias (unscaled)
        # cls_ref: (1, E)      cls token (never scaled)
        # o_ref:   (B, L+1, E) [cls ; scaled projection]
        x = x_ref[...].reshape(B * L, F)
        y = jnp.dot(x, w_ref[...], preferred_element_type=jnp.float32)  # MXU
        # in-kernel sqrt(E) scale on the f32 accumulator (bias scaled too,
        # matching torch's `linear(x) * sqrt(emsize)`)
        y = (y + b_ref[...].astype(jnp.float32)) * scale

        # cls token goes to sequence position 0 of every batch (unscaled).
        cls = jnp.broadcast_to(cls_ref[...].reshape(1, 1, E), (B, 1, E))
        o_ref[:, 0:1, :] = cls.astype(o_ref.dtype)
        o_ref[:, 1:, :] = y.reshape(B, L, E).astype(o_ref.dtype)

    return kernel


def walk_embedding(x, w, b, cls_token):
    """x: (B, L, F); w: (F, E); b: (E,); cls_token: (1, 1, E) -> (B, L+1, E)."""
    B, L, F = x.shape
    E = w.shape[1]

    kernel = _make_walk_embedding_kernel(B, L, F, E)

    vmem = pl.BlockSpec(memory_space=pltpu.MemorySpace.VMEM)
    return pl.pallas_call(
        kernel,
        out_shape=jax.ShapeDtypeStruct((B, L + 1, E), x.dtype),
        in_specs=[vmem, vmem, vmem, vmem],   # whole arrays, no grid/pipeline
        out_specs=vmem,
    )(x, w, b.reshape(1, E), cls_token.reshape(1, E))


if __name__ == "__main__":
    # Shapes implied by the module: batch=2, max_walk_len=8,
    # step_features=4, emsize=32.
    B, L, F, E = 2, 8, 4, 32

    key = jax.random.PRNGKey(0)
    kx, kw, kb, kc = jax.random.split(key, 4)

    x = jax.random.normal(kx, (B, L, F), dtype=jnp.float32)

    # nn.Linear(step_features, emsize): weight (E, F) xavier_uniform, bias (E,).
    # Deterministic synthetic init; weight stored pre-transposed as (F, E).
    bound_w = math.sqrt(6.0 / (F + E))
    w_t = jax.random.uniform(kw, (F, E), minval=-bound_w, maxval=bound_w,
                             dtype=jnp.float32)
    bound_b = 1.0 / math.sqrt(F)
    bias = jax.random.uniform(kb, (E,), minval=-bound_b, maxval=bound_b,
                              dtype=jnp.float32)
    # cls_token ~ randn(1, 1, emsize)
    cls_token = jax.random.normal(kc, (1, 1, E), dtype=jnp.float32)

    out = walk_embedding(x, w_t, bias, cls_token)
    out = jax.block_until_ready(out)

    # Reference (plain JAX), mirroring the PyTorch forward exactly:
    #   emb(x) * sqrt(E), then concat unscaled cls token at seq position 0.
    ref_emb = (jnp.einsum("blf,fe->ble", x, w_t) + bias) * math.sqrt(E)
    ref = jnp.concatenate([jnp.broadcast_to(cls_token, (B, 1, E)), ref_emb],
                          axis=1)
    assert out.shape == (B, L + 1, E)
    assert jnp.allclose(out, ref, atol=1e-5, rtol=1e-5)

    print("KERNEL_OK")
</pallas_src>

<mosaic_0001>
module attributes {stable_mosaic.version = 11 : i64} {
  func.func @kernel(%arg0: memref<2x8x4xf32, #tpu.memory_space<vmem>>, %arg1: memref<4x32xf32, #tpu.memory_space<vmem>>, %arg2: memref<1x32xf32, #tpu.memory_space<vmem>>, %arg3: memref<1x32xf32, #tpu.memory_space<vmem>>, %arg4: memref<2x9x32xf32, #tpu.memory_space<vmem>>) attributes {dimension_semantics = [], scalar_prefetch = 0 : i64, scratch_operands = 0 : i64, tpu.core_type = #tpu.core_type<tc>} {
    %c0 = arith.constant 0 : index
    %c0_0 = arith.constant 0 : index
    %c0_1 = arith.constant 0 : index
    %0 = vector.load %arg0[%c0, %c0_0, %c0_1] : memref<2x8x4xf32, #tpu.memory_space<vmem>>, vector<2x8x4xf32>
    %1 = vector.shape_cast %0 : vector<2x8x4xf32> to vector<16x4xf32>
    %c0_2 = arith.constant 0 : index
    %c0_3 = arith.constant 0 : index
    %2 = vector.load %arg1[%c0_2, %c0_3] : memref<4x32xf32, #tpu.memory_space<vmem>>, vector<4x32xf32>
    %cst = arith.constant dense<0.000000e+00> : vector<16x32xf32>
    %3 = tpu.matmul %1, %2, %cst {dimension_numbers = #tpu.dot_dimension_numbers<[1], [0], [0], [1], [0, 0, 1, 1], [], []>} : vector<16x4xf32>, vector<4x32xf32>, vector<16x32xf32> -> vector<16x32xf32>
    %c0_4 = arith.constant 0 : index
    %c0_5 = arith.constant 0 : index
    %4 = vector.load %arg2[%c0_4, %c0_5] : memref<1x32xf32, #tpu.memory_space<vmem>>, vector<1x32xf32>
    %5 = vector.broadcast %4 : vector<1x32xf32> to vector<16x32xf32>
    %6 = arith.addf %3, %5 : vector<16x32xf32>
    %cst_6 = arith.constant 5.65685415 : f32
    %7 = vector.broadcast %cst_6 : f32 to vector<16x32xf32>
    %8 = arith.mulf %6, %7 : vector<16x32xf32>
    %c0_7 = arith.constant 0 : index
    %c0_8 = arith.constant 0 : index
    %9 = vector.load %arg3[%c0_7, %c0_8] : memref<1x32xf32, #tpu.memory_space<vmem>>, vector<1x32xf32>
    %10 = vector.shape_cast %9 : vector<1x32xf32> to vector<1x1x32xf32>
    %11 = vector.shape_cast %10 : vector<1x1x32xf32> to vector<1x1x32xf32>
    %12 = vector.broadcast %11 : vector<1x1x32xf32> to vector<2x1x32xf32>
    %c0_9 = arith.constant 0 : index
    %c0_10 = arith.constant 0 : index
    %c0_11 = arith.constant 0 : index
    %13 = vector.load %arg4[%c0_9, %c0_10, %c0_11] : memref<2x9x32xf32, #tpu.memory_space<vmem>>, vector<2x1x32xf32>
    tpu.vector_store %arg4[%c0_9, %c0_10, %c0_11], %12 {strides = array<i32>} : memref<2x9x32xf32, #tpu.memory_space<vmem>>, vector<2x1x32xf32>,
    %14 = vector.shape_cast %8 : vector<16x32xf32> to vector<2x8x32xf32>
    %c0_12 = arith.constant 0 : index
    %c1 = arith.constant 1 : index
    %c0_13 = arith.constant 0 : index
    %15 = vector.load %arg4[%c0_12, %c1, %c0_13] : memref<2x9x32xf32, #tpu.memory_space<vmem>>, vector<2x8x32xf32>
    tpu.vector_store %arg4[%c0_12, %c1, %c0_13], %14 {strides = array<i32>} : memref<2x9x32xf32, #tpu.memory_space<vmem>>, vector<2x8x32xf32>,
    return
  }
}

</mosaic_0001>

<llo_original>
// kernel: tpu_custom_call.1
$region0: #{tpu_custom_call.1}
  #allocation0 [shape = 'u32[]', space=smem, size = 0x4, offset = 0x4, fixed_abs, tag = 'smem constant byte address 0x4 - core index']
  #allocation1 [shape = 'u32[144,128]{1,0:T(1,128)}', space=vmem, size = 0x12000, scoped, tag = 'internal scratch']
  %s0 = inlined_call_operand.vmem [shape: f32[2,8,4], index: 0, kind: input, shape index: {}]
  %s1 = inlined_call_operand.vmem [shape: f32[4,32], index: 1, kind: input, shape index: {}]
  %s2 = inlined_call_operand.vmem [shape: f32[1,32], index: 2, kind: input, shape index: {}]
  %s3 = inlined_call_operand.vmem [shape: f32[1,32], index: 3, kind: input, shape index: {}]
  %s4 = inlined_call_operand.vmem [shape: f32[2,9,32], index: 4, kind: output, shape index: {}]
  %s5 = sld [smem:[#allocation0]]
  $region26: #{tpu_custom_call.1} parent=0
    _
  %s7 = ssub.s32 1, %s5
  %s8 = scalar_select 0, %s7, %s5
  // Predicated region
  $region2: #{tpu_custom_call.1} parent=0 // pred_check
    _
  $region3: #{tpu_custom_call.1} parent=0 // pred_check_branch
    %10 = sbr.rel (0) target = $region5
  $region4: #{tpu_custom_call.1} parent=0 // pred_region
    _
  $region5: #{tpu_custom_call.1} parent=0 // pred_fallthru
    _
  // Predicated region
  $region6: #{tpu_custom_call.1} parent=0 // pred_check
    _
  $region7: #{tpu_custom_call.1} parent=0 // pred_check_branch
    %12 = sbr.rel (0) target = $region9
  $region8: #{tpu_custom_call.1} parent=0 // pred_region
    _
  $region9: #{tpu_custom_call.1} parent=0 // pred_fallthru
    _
  // Predicated region
  $region10: #{tpu_custom_call.1} parent=0 // pred_check
    _
  $region11: #{tpu_custom_call.1} parent=0 // pred_check_branch
    %14 = sbr.rel (0) target = $region13
  $region12: #{tpu_custom_call.1} parent=0 // pred_region
    _
  $region13: #{tpu_custom_call.1} parent=0 // pred_fallthru
    _
  // Predicated region
  $region14: #{tpu_custom_call.1} parent=0 // pred_check
    _
  $region15: #{tpu_custom_call.1} parent=0 // pred_check_branch
    %16 = sbr.rel (0) target = $region17
  $region16: #{tpu_custom_call.1} parent=0 // pred_region
    _
  $region17: #{tpu_custom_call.1} parent=0 // pred_fallthru
    _
  %v17 = vld [vmem:[%s0] sm:$0xff]
  %v18 = vld [vmem:[%s0 + $0x8] sm:$0xff]
  %v19 = vld [vmem:[%s1] sm:$0xf]
  %v20 = vld [vmem:[%s2] sm:$0x1]
  %v22 = vlaneseq
  %v23 = vshrl.u32 %v22, 7
  %v24 = vsub.s32 0, %v23
  %v25 = vrot.slane %v20, %v24
  %vm27 = vcmask 31744
  %v29 = vsel %vm27, %v17, 0
  %v32 = vsel %vm27, %v18, 0
  %vm34 = vcmask 1043456
  %v36 = vsel %vm34, %v19, 0
  %38 = vmatprep.subr.mxu0 0.0
  %39 = vmatpush1.msra.mxu0 0.0
  %40 = vmatprep.subr.mxu0 0.0
  %41 = vmatpush1.msra.mxu0 0.0
  %42 = vmatprep.subr.mxu0 0.0
  %43 = vmatpush1.msra.mxu0 0.0
  %44 = vmatprep.subr.mxu0 0.0
  %45 = vmatpush1.msra.mxu0 0.0
  %46 = vmatprep.subr.mxu0 0.0
  %47 = vmatpush1.msra.mxu0 0.0
  %48 = vmatprep.subr.mxu0 0.0
  %49 = vmatpush1.msra.mxu0 0.0
  %50 = vmatprep.subr.mxu0 0.0
  %51 = vmatpush1.msra.mxu0 0.0
  %52 = vmatprep.subr.mxu0 0.0
  %53 = vmatpush1.msra.mxu0 0.0
  %54 = vmatprep.subr.mxu0 0.0
  %55 = vmatpush1.msra.mxu0 0.0
  %56 = vmatprep.subr.mxu0 0.0
  %57 = vmatpush1.msra.mxu0 0.0
  %58 = vmatprep.subr.mxu0 0.0
  %59 = vmatpush1.msra.mxu0 0.0
  %60 = vmatprep.subr.mxu0 0.0
  %61 = vmatpush1.msra.mxu0 0.0
  %62 = vmatprep.subr.mxu0 0.0
  %63 = vmatpush1.msra.mxu0 0.0
  %64 = vmatprep.subr.mxu0 0.0
  %65 = vmatpush1.msra.mxu0 0.0
  %66 = vmatprep.subr.mxu0 0.0
  %67 = vmatpush1.msra.mxu0 0.0
  %68 = vmatprep.subr.mxu0 0.0
  %69 = vmatpush1.msra.mxu0 %v36
  %70 = vmatprep.subr.mxu0 0.0
  %71 = vmatpush2.msra.mxu0 0.0
  %72 = vmatprep.subr.mxu0 0.0
  %73 = vmatpush2.msra.mxu0 0.0
  %74 = vmatprep.subr.mxu0 0.0
  %75 = vmatpush2.msra.mxu0 0.0
  %76 = vmatprep.subr.mxu0 0.0
  %77 = vmatpush2.msra.mxu0 0.0
  %78 = vmatprep.subr.mxu0 0.0
  %79 = vmatpush2.msra.mxu0 0.0
  %80 = vmatprep.subr.mxu0 0.0
  %81 = vmatpush2.msra.mxu0 0.0
  %82 = vmatprep.subr.mxu0 0.0
  %83 = vmatpush2.msra.mxu0 0.0
  %84 = vmatprep.subr.mxu0 0.0
  %85 = vmatpush2.msra.mxu0 0.0
  %86 = vmatprep.subr.mxu0 0.0
  %87 = vmatpush2.msra.mxu0 0.0
  %88 = vmatprep.subr.mxu0 0.0
  %89 = vmatpush2.msra.mxu0 0.0
  %90 = vmatprep.subr.mxu0 0.0
  %91 = vmatpush2.msra.mxu0 0.0
  %92 = vmatprep.subr.mxu0 0.0
  %93 = vmatpush2.msra.mxu0 0.0
  %94 = vmatprep.subr.mxu0 0.0
  %95 = vmatpush2.msra.mxu0 0.0
  %96 = vmatprep.subr.mxu0 0.0
  %97 = vmatpush2.msra.mxu0 0.0
  %98 = vmatprep.subr.mxu0 0.0
  %99 = vmatpush2.msra.mxu0 0.0
  %100 = vmatprep.subr.mxu0 0.0
  %101 = vmatpush2.msra.mxu0 0.0
  %102 = vmatprep.mubr.f32.mxu0 0.0
  %103 = vmatmul.mubr.f32.gmra.mxu0 %v29
  %v104 = vpop.f32.mrf.mxu0
  %v105 = vadd.f32 %v25, %v104
  %v106 = vpop.f32.mrf.mxu0
  %107 = vmatprep.mubr.f32.mxu0 0.0
  %108 = vmatmul.mubr.f32.gmra.mxu0 %v32
  %v109 = vpop.f32.mrf.mxu0
  %v110 = vadd.f32 %v25, %v109
  %v111 = vpop.f32.mrf.mxu0
  %112 = vdwg.mxu0
  %v113 = vmul.f32 %v105, 5.656854
  %v114 = vmul.f32 %v110, 5.656854
  %v115 = vld [vmem:[%s3] sm:$0x1]
  %vm116 = vcmask 253952
  %117 = vst.msk [vmem:[%s4] sm:$0x1] %vm116, %v115
  %118 = vst.msk [vmem:[%s4 + $0x10] sm:$0x1] %vm116, %v115
  %vm119 = vcmask 261120
  %120 = vst.msk [vmem:[%s4 + $0x1] sm:$0xff] %vm119, %v113
  %121 = vst.msk [vmem:[%s4 + $0x11] sm:$0xff] %vm119, %v114
  // Predicated region
  $region18: #{tpu_custom_call.1} parent=0 // pred_check
    _
  $region19: #{tpu_custom_call.1} parent=0 // pred_check_branch
    %123 = sbr.rel (0) target = $region21
  $region20: #{tpu_custom_call.1} parent=0 // pred_region
    _
  $region21: #{tpu_custom_call.1} parent=0 // pred_fallthru
    _
  // Predicated region
  $region22: #{tpu_custom_call.1} parent=0 // pred_check
    _
  $region23: #{tpu_custom_call.1} parent=0 // pred_check_branch
    %125 = sbr.rel (0) target = $region25
  $region24: #{tpu_custom_call.1} parent=0 // pred_region
    _
  $region25: #{tpu_custom_call.1} parent=0 // pred_fallthru
    _

</llo_original>
